<compile_context>
chip_gen: v5e
topology: v5e:2x2
jax: 0.10.0
libtpu: 0.0.40
codegen_flags: <defaults>
</compile_context>

<pallas_src>
import functools

import jax
import jax.numpy as jnp
from jax.experimental import pallas as pl
from jax.experimental.pallas import tpu as pltpu


def _mlp_edge_kernel(num_layers, x_ref, *refs):
    """Fused MLP kernel, transposed layout.

    refs layout: w0_ref, b0_ref, w1_ref, b1_ref, ..., out_ref
      x_ref : (K0, TILE_B)        compute_dtype   (K0 = dim_in + num_parent)
      w_ref : (out_k, in_k)       compute_dtype   (PyTorch weight, i.e. W, not W.T)
      b_ref : (out_k, 1)          float32
      out   : (dim_out, TILE_B)   float32
    """
    out_ref = refs[-1]
    param_refs = refs[:-1]
    compute_dtype = x_ref.dtype

    h = x_ref[...]                                    # (K0, TILE_B)
    idx = 0
    for layer in range(num_layers):
        w, b = param_refs[idx], param_refs[idx + 1]
        idx += 2
        # MXU matmul with f32 accumulation; bias broadcast along lanes (batch).
        pre = jnp.dot(w[...], h, preferred_element_type=jnp.float32) + b[...]
        if layer < num_layers - 1:
            h = jnp.tanh(pre).astype(compute_dtype)   # EUP tanh in f32, cast back
        else:
            out_ref[...] = pre.astype(out_ref.dtype)


def fully_connected_nn_edge_forward(xinput, parent_vals, params, *,
                                    tile_b=512, compute_dtype=jnp.float32):
    """Runs the fused MLP Pallas kernel.

    xinput:      (B, dim_in)       float32
    parent_vals: (B, num_parent)   float32
    params:      list of (W, b) with W stored as (in, out), b as (out,)
                 (mathematically identical to PyTorch y = x @ W.T + b)
    """
    B = xinput.shape[0]
    num_layers = len(params)
    dim_out = params[-1][0].shape[1]

    # --- fuse the concat in the wrapper, move batch to the lane axis -------
    xin = jnp.concatenate([xinput, parent_vals], axis=-1)     # (B, K0)
    k0 = xin.shape[-1]

    # Lane-aligned batch tile (multiple of 128), no bigger than needed.
    b_round = pl.cdiv(B, 128) * 128
    tile_b = max(128, (min(int(tile_b), b_round) // 128) * 128)
    num_tiles = pl.cdiv(B, tile_b)
    b_pad = num_tiles * tile_b
    if b_pad != B:
        xin = jnp.pad(xin, ((0, b_pad - B), (0, 0)))
    x_t = xin.T.astype(compute_dtype)                          # (K0, b_pad)

    # --- kernel operands & BlockSpecs --------------------------------------
    kernel_inputs = [x_t]
    in_specs = [pl.BlockSpec((k0, tile_b), lambda i: (0, i))]  # batch-tiled input

    for w, b in params:
        w_t = jnp.asarray(w).T.astype(compute_dtype)           # (out, in)
        b_col = jnp.asarray(b).reshape(-1, 1).astype(jnp.float32)
        kernel_inputs.append(w_t)
        in_specs.append(pl.BlockSpec(w_t.shape, lambda i: (0, 0)))   # resident
        kernel_inputs.append(b_col)
        in_specs.append(pl.BlockSpec(b_col.shape, lambda i: (0, 0)))  # resident

    out_specs = pl.BlockSpec((dim_out, tile_b), lambda i: (0, i))     # lane-dense

    # --- cost estimate hint for the XLA scheduler ---------------------------
    itemsize = jnp.dtype(compute_dtype).itemsize
    flops = 2 * b_pad * sum(int(w.shape[0]) * int(w.shape[1]) for w, _ in params)
    transcendentals = b_pad * sum(int(w.shape[1]) for w, _ in params[:-1])
    bytes_accessed = (
        x_t.size * itemsize                                     # input reads
        + b_pad * dim_out * 4                                   # output writes
        + sum(int(w.size) * itemsize + int(b.size) * 4 for w, b in params)
    )

    out_t = pl.pallas_call(
        functools.partial(_mlp_edge_kernel, num_layers),
        out_shape=jax.ShapeDtypeStruct((dim_out, b_pad), jnp.float32),
        grid=(num_tiles,),
        in_specs=in_specs,
        out_specs=out_specs,
        compiler_params=pltpu.CompilerParams(
            dimension_semantics=("parallel",)),
        cost_estimate=pl.CostEstimate(
            flops=int(flops),
            transcendentals=int(transcendentals),
            bytes_accessed=int(bytes_accessed)),
    )(*kernel_inputs)

    # Back to PyTorch layout (B, dim_out), dropping batch padding.
    return out_t[:, :B].T


def init_params(key, dim_in, dim_out, num_parent_vals_in, hidden_layer_sizes):
    """Deterministic PyTorch-style (uniform +-1/sqrt(fan_in)) initialization.

    Returns a list of (W, b); W stored as (fan_in, fan_out).
    """
    sizes = [dim_in + num_parent_vals_in] + list(hidden_layer_sizes) + [dim_out]
    params = []
    for fan_in, fan_out in zip(sizes[:-1], sizes[1:]):
        key, kw, kb = jax.random.split(key, 3)
        bound = 1.0 / jnp.sqrt(jnp.float32(fan_in))
        w = jax.random.uniform(kw, (fan_in, fan_out), jnp.float32, -bound, bound)
        b = jax.random.uniform(kb, (fan_out,), jnp.float32, -bound, bound)
        params.append((w, b))
    return params


def reference_forward(xinput, parent_vals, params):
    """Pure-JAX reference matching the PyTorch module."""
    x = jnp.concatenate([xinput, parent_vals], axis=-1)
    for i, (w, b) in enumerate(params):
        x = x @ w + b
        if i < len(params) - 1:
            x = jnp.tanh(x)
    return x


if __name__ == "__main__":
    dim_in = 4
    num_parent_vals_in = 3
    dim_out = 2
    hidden_layer_sizes = [32, 16]

    key = jax.random.PRNGKey(0)
    kx, kp, kparams = jax.random.split(key, 3)
    params = init_params(kparams, dim_in, dim_out, num_parent_vals_in,
                         hidden_layer_sizes)

    # --- check 1: small batch, single batch tile, f32 -----------------------
    batch = 8
    xinput = jax.random.normal(kx, (batch, dim_in), jnp.float32)
    parent_vals = jax.random.normal(kp, (batch, num_parent_vals_in), jnp.float32)

    out = fully_connected_nn_edge_forward(xinput, parent_vals, params)
    out = jax.block_until_ready(out)
    ref = reference_forward(xinput, parent_vals, params)
    assert out.shape == (batch, dim_out)
    assert jnp.allclose(out, ref, atol=1e-5, rtol=1e-5), (out, ref)

    # --- check 2: batch not divisible by the tile -> multi-tile grid + pad --
    batch2 = 200
    kx2, kp2 = jax.random.split(jax.random.PRNGKey(1))
    xinput2 = jax.random.normal(kx2, (batch2, dim_in), jnp.float32)
    parent_vals2 = jax.random.normal(kp2, (batch2, num_parent_vals_in), jnp.float32)

    out2 = fully_connected_nn_edge_forward(xinput2, parent_vals2, params,
                                           tile_b=128)
    out2 = jax.block_until_ready(out2)
    ref2 = reference_forward(xinput2, parent_vals2, params)
    assert out2.shape == (batch2, dim_out)
    assert jnp.allclose(out2, ref2, atol=1e-5, rtol=1e-5)

    # --- check 3: bf16 compute path (halves HBM read traffic), loose check --
    out_bf16 = fully_connected_nn_edge_forward(xinput2, parent_vals2, params,
                                               tile_b=128,
                                               compute_dtype=jnp.bfloat16)
    out_bf16 = jax.block_until_ready(out_bf16)
    assert out_bf16.shape == (batch2, dim_out)
    assert bool(jnp.all(jnp.isfinite(out_bf16)))
    assert jnp.allclose(out_bf16, ref2, atol=1e-1, rtol=1e-1)

    print("KERNEL_OK")
</pallas_src>

<mosaic_0001>
module attributes {stable_mosaic.version = 11 : i64} {
  func.func @_mlp_edge_kernel(%arg0: i32, %arg1: memref<7x128xf32, #tpu.memory_space<vmem>>, %arg2: memref<32x7xf32, #tpu.memory_space<vmem>>, %arg3: memref<32x1xf32, #tpu.memory_space<vmem>>, %arg4: memref<16x32xf32, #tpu.memory_space<vmem>>, %arg5: memref<16x1xf32, #tpu.memory_space<vmem>>, %arg6: memref<2x16xf32, #tpu.memory_space<vmem>>, %arg7: memref<2x1xf32, #tpu.memory_space<vmem>>, %arg8: memref<2x128xf32, #tpu.memory_space<vmem>>) attributes {dimension_semantics = [#tpu.dimension_semantics<parallel>], iteration_bounds = array<i64: 1>, scalar_prefetch = 0 : i64, scratch_operands = 0 : i64, tpu.core_type = #tpu.core_type<tc>, window_params = [{transform_indices = @transform_0, window_bounds = array<i64: 7, 128>}, {pipeline_mode = #tpu.pipeline_mode<synchronous>, transform_indices = @transform_1, window_bounds = array<i64: 32, 7>}, {pipeline_mode = #tpu.pipeline_mode<synchronous>, transform_indices = @transform_2, window_bounds = array<i64: 32, 1>}, {pipeline_mode = #tpu.pipeline_mode<synchronous>, transform_indices = @transform_3, window_bounds = array<i64: 16, 32>}, {pipeline_mode = #tpu.pipeline_mode<synchronous>, transform_indices = @transform_4, window_bounds = array<i64: 16, 1>}, {pipeline_mode = #tpu.pipeline_mode<synchronous>, transform_indices = @transform_5, window_bounds = array<i64: 2, 16>}, {pipeline_mode = #tpu.pipeline_mode<synchronous>, transform_indices = @transform_6, window_bounds = array<i64: 2, 1>}, {transform_indices = @transform_7, window_bounds = array<i64: 2, 128>}]} {
    %c0 = arith.constant 0 : index
    %c0_0 = arith.constant 0 : index
    %0 = vector.load %arg1[%c0, %c0_0] : memref<7x128xf32, #tpu.memory_space<vmem>>, vector<7x128xf32>
    %c0_1 = arith.constant 0 : index
    %c0_2 = arith.constant 0 : index
    %1 = vector.load %arg2[%c0_1, %c0_2] : memref<32x7xf32, #tpu.memory_space<vmem>>, vector<32x7xf32>
    %cst = arith.constant dense<0.000000e+00> : vector<32x128xf32>
    %2 = tpu.matmul %1, %0, %cst {dimension_numbers = #tpu.dot_dimension_numbers<[1], [0], [0], [1], [0, 0, 1, 1], [], []>} : vector<32x7xf32>, vector<7x128xf32>, vector<32x128xf32> -> vector<32x128xf32>
    %c0_3 = arith.constant 0 : index
    %c0_4 = arith.constant 0 : index
    %3 = vector.load %arg3[%c0_3, %c0_4] : memref<32x1xf32, #tpu.memory_space<vmem>>, vector<32x1xf32>
    %4 = vector.broadcast %3 : vector<32x1xf32> to vector<32x128xf32>
    %5 = arith.addf %2, %4 : vector<32x128xf32>
    %6 = math.tanh %5 : vector<32x128xf32>
    %c0_5 = arith.constant 0 : index
    %c0_6 = arith.constant 0 : index
    %7 = vector.load %arg4[%c0_5, %c0_6] : memref<16x32xf32, #tpu.memory_space<vmem>>, vector<16x32xf32>
    %cst_7 = arith.constant dense<0.000000e+00> : vector<16x128xf32>
    %8 = tpu.matmul %7, %6, %cst_7 {dimension_numbers = #tpu.dot_dimension_numbers<[1], [0], [0], [1], [0, 0, 1, 1], [], []>} : vector<16x32xf32>, vector<32x128xf32>, vector<16x128xf32> -> vector<16x128xf32>
    %c0_8 = arith.constant 0 : index
    %c0_9 = arith.constant 0 : index
    %9 = vector.load %arg5[%c0_8, %c0_9] : memref<16x1xf32, #tpu.memory_space<vmem>>, vector<16x1xf32>
    %10 = vector.broadcast %9 : vector<16x1xf32> to vector<16x128xf32>
    %11 = arith.addf %8, %10 : vector<16x128xf32>
    %12 = math.tanh %11 : vector<16x128xf32>
    %c0_10 = arith.constant 0 : index
    %c0_11 = arith.constant 0 : index
    %13 = vector.load %arg6[%c0_10, %c0_11] : memref<2x16xf32, #tpu.memory_space<vmem>>, vector<2x16xf32>
    %cst_12 = arith.constant dense<0.000000e+00> : vector<2x128xf32>
    %14 = tpu.matmul %13, %12, %cst_12 {dimension_numbers = #tpu.dot_dimension_numbers<[1], [0], [0], [1], [0, 0, 1, 1], [], []>} : vector<2x16xf32>, vector<16x128xf32>, vector<2x128xf32> -> vector<2x128xf32>
    %c0_13 = arith.constant 0 : index
    %c0_14 = arith.constant 0 : index
    %15 = vector.load %arg7[%c0_13, %c0_14] : memref<2x1xf32, #tpu.memory_space<vmem>>, vector<2x1xf32>
    %16 = vector.broadcast %15 : vector<2x1xf32> to vector<2x128xf32>
    %17 = arith.addf %14, %16 : vector<2x128xf32>
    %c0_15 = arith.constant 0 : index
    %c0_16 = arith.constant 0 : index
    %18 = vector.load %arg8[%c0_15, %c0_16] : memref<2x128xf32, #tpu.memory_space<vmem>>, vector<2x128xf32>
    tpu.vector_store %arg8[%c0_15, %c0_16], %17 {strides = array<i32>} : memref<2x128xf32, #tpu.memory_space<vmem>>, vector<2x128xf32>,
    return
  }
  func.func @transform_0(%arg0: i32) -> (i32, i32) {
    %c0_i32 = arith.constant 0 : i32
    %c0_i32_0 = arith.constant 0 : i32
    return %c0_i32, %arg0 : i32, i32
  }
  func.func @transform_1(%arg0: i32) -> (i32, i32) {
    %c0_i32 = arith.constant 0 : i32
    %c0_i32_0 = arith.constant 0 : i32
    %c0_i32_1 = arith.constant 0 : i32
    return %c0_i32, %c0_i32_0 : i32, i32
  }
  func.func @transform_2(%arg0: i32) -> (i32, i32) {
    %c0_i32 = arith.constant 0 : i32
    %c0_i32_0 = arith.constant 0 : i32
    %c0_i32_1 = arith.constant 0 : i32
    return %c0_i32, %c0_i32_0 : i32, i32
  }
  func.func @transform_3(%arg0: i32) -> (i32, i32) {
    %c0_i32 = arith.constant 0 : i32
    %c0_i32_0 = arith.constant 0 : i32
    %c0_i32_1 = arith.constant 0 : i32
    return %c0_i32, %c0_i32_0 : i32, i32
  }
  func.func @transform_4(%arg0: i32) -> (i32, i32) {
    %c0_i32 = arith.constant 0 : i32
    %c0_i32_0 = arith.constant 0 : i32
    %c0_i32_1 = arith.constant 0 : i32
    return %c0_i32, %c0_i32_0 : i32, i32
  }
  func.func @transform_5(%arg0: i32) -> (i32, i32) {
    %c0_i32 = arith.constant 0 : i32
    %c0_i32_0 = arith.constant 0 : i32
    %c0_i32_1 = arith.constant 0 : i32
    return %c0_i32, %c0_i32_0 : i32, i32
  }
  func.func @transform_6(%arg0: i32) -> (i32, i32) {
    %c0_i32 = arith.constant 0 : i32
    %c0_i32_0 = arith.constant 0 : i32
    %c0_i32_1 = arith.constant 0 : i32
    return %c0_i32, %c0_i32_0 : i32, i32
  }
  func.func @transform_7(%arg0: i32) -> (i32, i32) {
    %c0_i32 = arith.constant 0 : i32
    %c0_i32_0 = arith.constant 0 : i32
    return %c0_i32, %arg0 : i32, i32
  }
}

</mosaic_0001>

<llo_original>
// kernel: tpu_custom_call.1
$region0: #{tpu_custom_call.1}
  #allocation0 [shape = 'u32[]', space=smem, size = 0x4, offset = 0x4, fixed_abs, tag = 'smem constant byte address 0x4 - core index']
  #allocation1 [shape = 'u32[72,128]{1,0:T(1,128)}', space=vmem, size = 0x9000, scoped, tag = 'internal scratch']
  %s0 = inlined_call_operand.vmem [shape: f32[7,128], index: 0, kind: input, shape index: {}]
  %s1 = inlined_call_operand.vmem [shape: f32[32,7], index: 1, kind: input, shape index: {}]
  %s2 = inlined_call_operand.vmem [shape: f32[32,1], index: 2, kind: input, shape index: {}]
  %s3 = inlined_call_operand.vmem [shape: f32[16,32], index: 3, kind: input, shape index: {}]
  %s4 = inlined_call_operand.vmem [shape: f32[16,1], index: 4, kind: input, shape index: {}]
  %s5 = inlined_call_operand.vmem [shape: f32[2,16], index: 5, kind: input, shape index: {}]
  %s6 = inlined_call_operand.vmem [shape: f32[2,1], index: 6, kind: input, shape index: {}]
  %s7 = inlined_call_operand.hbm [shape: f32[2,128], index: 7, kind: output, shape index: {}]
  %s8 = sld [smem:[#allocation0]]
  $region38: #{tpu_custom_call.1} parent=0
    _
  %s10 = ssub.s32 1, %s8
  %s11 = scalar_select 0, %s10, %s8
  $region1: #{tpu_custom_call.1} parent=0
    #allocation2 [shape = 'u8[1024]{0}', space=vmem, size = 0x400, scoped, tag = 'output window, operand 0, single buffered']
    #allocation3 [shape = 's32[1]{0}', space=sflag, size = 0x4, scoped, tag = 'scoped memory for tpu_custom_call.1']
    %12 = vsyncpa [#allocation3], 0
    // Predicated region
    $region2: #{tpu_custom_call.1} parent=1 // pred_check
      _
    $region3: #{tpu_custom_call.1} parent=1 // pred_check_branch
      %14 = sbr.rel (0) target = $region5
    $region4: #{tpu_custom_call.1} parent=1 // pred_region
      _
    $region5: #{tpu_custom_call.1} parent=1 // pred_fallthru
      _
    // Predicated region
    $region6: #{tpu_custom_call.1} parent=1 // pred_check
      _
    $region7: #{tpu_custom_call.1} parent=1 // pred_check_branch
      %16 = sbr.rel (0) target = $region9
    $region8: #{tpu_custom_call.1} parent=1 // pred_region
      _
    $region9: #{tpu_custom_call.1} parent=1 // pred_fallthru
      _
    // Predicated region
    $region10: #{tpu_custom_call.1} parent=1 // pred_check
      _
    $region11: #{tpu_custom_call.1} parent=1 // pred_check_branch
      %18 = sbr.rel (0) target = $region13
    $region12: #{tpu_custom_call.1} parent=1 // pred_region
      _
    $region13: #{tpu_custom_call.1} parent=1 // pred_fallthru
      _
    // Predicated region
    $region14: #{tpu_custom_call.1} parent=1 // pred_check
      _
    $region15: #{tpu_custom_call.1} parent=1 // pred_check_branch
      %20 = sbr.rel (0) target = $region17
    $region16: #{tpu_custom_call.1} parent=1 // pred_region
      _
    $region17: #{tpu_custom_call.1} parent=1 // pred_fallthru
      _
    // Predicated region
    $region18: #{tpu_custom_call.1} parent=1 // pred_check
      _
    $region19: #{tpu_custom_call.1} parent=1 // pred_check_branch
      %22 = sbr.rel (0) target = $region21
    $region20: #{tpu_custom_call.1} parent=1 // pred_region
      _
    $region21: #{tpu_custom_call.1} parent=1 // pred_fallthru
      _
    // Predicated region
    $region22: #{tpu_custom_call.1} parent=1 // pred_check
      _
    $region23: #{tpu_custom_call.1} parent=1 // pred_check_branch
      %24 = sbr.rel (0) target = $region25
    $region24: #{tpu_custom_call.1} parent=1 // pred_region
      _
    $region25: #{tpu_custom_call.1} parent=1 // pred_fallthru
      _
    // Predicated region
    $region26: #{tpu_custom_call.1} parent=1 // pred_check
      _
    $region27: #{tpu_custom_call.1} parent=1 // pred_check_branch
      %26 = sbr.rel (0) target = $region29
    $region28: #{tpu_custom_call.1} parent=1 // pred_region
      _
    $region29: #{tpu_custom_call.1} parent=1 // pred_fallthru
      _
    %v27 = vld [vmem:[%s0] sm:$0x7f]
    %v28 = vld [vmem:[%s1] sm:$0xff]
    %v29 = vld [vmem:[%s1 + $0x8] sm:$0xff]
    %v30 = vld [vmem:[%s1 + $0x10] sm:$0xff]
    %v31 = vld [vmem:[%s1 + $0x18] sm:$0xff]
    %v32 = vld [vmem:[%s2] sm:$0xff]
    %v33 = vld [vmem:[%s2 + $0x8] sm:$0xff]
    %v34 = vld [vmem:[%s2 + $0x10] sm:$0xff]
    %v35 = vld [vmem:[%s2 + $0x18] sm:$0xff]
    %37 = vset.pattern.permute.xlu0 0
    %38 = vperm.xlu0 %37, %v32
    %v39 = vpop.permute.xlu0 %38
    %42 = vset.pattern.permute.xlu0 0
    %43 = vperm.xlu0 %42, %v33
    %v44 = vpop.permute.xlu0 %43
    %47 = vset.pattern.permute.xlu0 0
    %48 = vperm.xlu0 %47, %v34
    %v49 = vpop.permute.xlu0 %48
    %52 = vset.pattern.permute.xlu0 0
    %53 = vperm.xlu0 %52, %v35
    %v54 = vpop.permute.xlu0 %53
    %vm56 = vcmask 56320
    %v58 = vsel %vm56, %v28, 0
    %v61 = vsel %vm56, %v29, 0
    %v64 = vsel %vm56, %v30, 0
    %v67 = vsel %vm56, %v31, 0
    %vm69 = vcmask 1046528
    %v71 = vsel %vm69, %v27, 0
    %73 = vmatpush.msra.mxu0 0.0
    %74 = vmatpush.msra.mxu0 0.0
    %75 = vmatpush.msra.mxu0 0.0
    %76 = vmatpush.msra.mxu0 0.0
    %77 = vmatpush.msra.mxu0 0.0
    %78 = vmatpush.msra.mxu0 0.0
    %79 = vmatpush.msra.mxu0 0.0
    %80 = vmatpush.msra.mxu0 0.0
    %81 = vmatpush.msra.mxu0 0.0
    %82 = vmatpush.msra.mxu0 0.0
    %83 = vmatpush.msra.mxu0 0.0
    %84 = vmatpush.msra.mxu0 0.0
    %85 = vmatpush.msra.mxu0 0.0
    %86 = vmatpush.msra.mxu0 0.0
    %87 = vmatpush.msra.mxu0 0.0
    %88 = vmatpush.msra.mxu0 %v71
    %89 = vmatmul.f32.gmra.mxu0 %v58
    %v90 = vpop.f32.mrf.mxu0
    %v91 = vadd.f32 %v39, %v90
    %92 = vmatmul.f32.gmra.mxu0 %v61
    %v93 = vpop.f32.mrf.mxu0
    %v94 = vadd.f32 %v44, %v93
    %95 = vmatmul.f32.gmra.mxu0 %v64
    %v96 = vpop.f32.mrf.mxu0
    %v97 = vadd.f32 %v49, %v96
    %98 = vmatmul.f32.gmra.mxu0 %v67
    %v99 = vpop.f32.mrf.mxu0
    %v100 = vadd.f32 %v54, %v99
    %101 = vdwg.mxu0
    %v102 = vtanh.pop %v91
    %v103 = vtanh.pop %v94
    %v104 = vtanh.pop %v97
    %v105 = vtanh.pop %v100
    %v106 = vld [vmem:[%s3] sm:$0xff]
    %v107 = vld [vmem:[%s3 + $0x8] sm:$0xff]
    %v108 = vld [vmem:[%s4] sm:$0xff]
    %v109 = vld [vmem:[%s4 + $0x8] sm:$0xff]
    %111 = vset.pattern.permute.xlu0 0
    %112 = vperm.xlu0 %111, %v108
    %v113 = vpop.permute.xlu0 %112
    %116 = vset.pattern.permute.xlu0 0
    %117 = vperm.xlu0 %116, %v109
    %v118 = vpop.permute.xlu0 %117
    %vm120 = vcmask 261120
    %v122 = vsel %vm120, %v106, 0
    %v125 = vsel %vm120, %v107, 0
    %127 = vmatpush.msra.mxu0 0.0
    %128 = vmatpush.msra.mxu0 0.0
    %129 = vmatpush.msra.mxu0 0.0
    %130 = vmatpush.msra.mxu0 0.0
    %131 = vmatpush.msra.mxu0 0.0
    %132 = vmatpush.msra.mxu0 0.0
    %133 = vmatpush.msra.mxu0 0.0
    %134 = vmatpush.msra.mxu0 0.0
    %135 = vmatpush.msra.mxu0 0.0
    %136 = vmatpush.msra.mxu0 0.0
    %137 = vmatpush.msra.mxu0 0.0
    %138 = vmatpush.msra.mxu0 0.0
    %139 = vmatpush.msra.mxu0 %v105
    %140 = vmatpush.msra.mxu0 %v104
    %141 = vmatpush.msra.mxu0 %v103
    %142 = vmatpush.msra.mxu0 %v102
    %143 = vmatmul.f32.gmra.mxu0 %v122
    %v144 = vpop.f32.mrf.mxu0
    %v145 = vadd.f32 %v113, %v144
    %146 = vmatmul.f32.gmra.mxu0 %v125
    %v147 = vpop.f32.mrf.mxu0
    %v148 = vadd.f32 %v118, %v147
    %149 = vdwg.mxu0
    %v150 = vtanh.pop %v145
    %v151 = vtanh.pop %v148
    %v152 = vld [vmem:[%s5] sm:$0x3]
    %v153 = vld [vmem:[%s6] sm:$0x3]
    %155 = vset.pattern.permute.xlu0 0
    %156 = vperm.xlu0 %155, %v153
    %v157 = vpop.permute.xlu0 %156
    %vm159 = vcmask 130048
    %v161 = vsel %vm159, %v152, 0
    %163 = vmatpush.msra.mxu0 0.0
    %164 = vmatpush.msra.mxu0 0.0
    %165 = vmatpush.msra.mxu0 0.0
    %166 = vmatpush.msra.mxu0 0.0
    %167 = vmatpush.msra.mxu0 0.0
    %168 = vmatpush.msra.mxu0 0.0
    %169 = vmatpush.msra.mxu0 0.0
    %170 = vmatpush.msra.mxu0 0.0
    %171 = vmatpush.msra.mxu0 0.0
    %172 = vmatpush.msra.mxu0 0.0
    %173 = vmatpush.msra.mxu0 0.0
    %174 = vmatpush.msra.mxu0 0.0
    %175 = vmatpush.msra.mxu0 0.0
    %176 = vmatpush.msra.mxu0 0.0
    %177 = vmatpush.msra.mxu0 %v151
    %178 = vmatpush.msra.mxu0 %v150
    %179 = vmatmul.f32.gmra.mxu0 %v161
    %v180 = vpop.f32.mrf.mxu0
    %v181 = vadd.f32 %v157, %v180
    %182 = vdwg.mxu0
    %183 = vst [vmem:[#allocation2] sm:$0x3] %v181
    // Predicated region
    $region30: #{tpu_custom_call.1} parent=1 // pred_check
      _
    $region31: #{tpu_custom_call.1} parent=1 // pred_check_branch
      %185 = sbr.rel (0) target = $region33
    $region32: #{tpu_custom_call.1} parent=1 // pred_region
      %187 = vsyncadd [#allocation3], 0
      %s189 = sshll.u32 [#allocation2], 4
      %s190 = int_to_ptr.vmem [resolvable:$true] %s189
      %s191 = sshll.u32 %s7, 4
      %s192 = int_to_ptr.hbm [resolvable:$true] %s191
      %194 = dma.vmem_to_hbm [thread:$0]  %s190, 32, %s192, [#allocation3]
    $region33: #{tpu_custom_call.1} parent=1 // pred_fallthru
      _
    // Predicated region
    $region34: #{tpu_custom_call.1} parent=1 // pred_check
      _
    $region35: #{tpu_custom_call.1} parent=1 // pred_check_branch
      %196 = sbr.rel (0) target = $region37
    $region36: #{tpu_custom_call.1} parent=1 // pred_region
      %198 = dma.done [#allocation3], 32
    $region37: #{tpu_custom_call.1} parent=1 // pred_fallthru
      _
    %199 = vsyncpa [#allocation3], 1

</llo_original>
